<compile_context>
chip_gen: v5e
topology: v5e:2x2
jax: 0.10.0
libtpu: 0.0.40
codegen_flags: <defaults>
</compile_context>

<pallas_src>
import functools
import math

import jax
import jax.numpy as jnp
from jax import lax
from jax.experimental import pallas as pl
from jax.experimental.pallas import tpu as pltpu


def _round_up(n, m):
    return ((n + m - 1) // m) * m


def _spiking_layer_kernel(x_ref, wt_ref, b_ref, v_ref, spikes_ref, v_out_ref,
                          *, threshold, leak_factor, time_steps):
    # x_ref : (in, block_b)   wt_ref : (out, in)   b_ref : (out, 1)
    # v_ref : (out, block_b)  spikes_ref : (T, out, block_b)  v_out_ref : (out, block_b)
    #
    # Linear on the MXU with f32 accumulation. x does not change inside forward(), so
    # the matmul is computed once per tile and reused for every time step.
    current = jnp.dot(wt_ref[...], x_ref[...],
                      preferred_element_type=jnp.float32) + b_ref[...]
    v = v_ref[...]

    if time_steps <= 16:
        # Static unroll over the (small) number of time steps; v and the spike tiles
        # stay in vregs, then the whole (T, out, block_b) slab is stored once.
        steps = []
        for _ in range(time_steps):
            v = v * leak_factor + current
            fired = v >= threshold
            v = jnp.where(fired, 0.0, v)          # hard reset where a spike fired
            steps.append(fired.astype(spikes_ref.dtype))
        spikes_ref[...] = jnp.stack(steps, axis=0)
    else:
        # Bound vreg live ranges for long horizons; each per-step store is still
        # fully lane-dense and the tile is still a single writeback DMA.
        def body(t, v_carry):
            v_new = v_carry * leak_factor + current
            fired = v_new >= threshold
            spikes_ref[t] = fired.astype(spikes_ref.dtype)
            return jnp.where(fired, 0.0, v_new)
        v = lax.fori_loop(0, time_steps, body, v, unroll=2)

    v_out_ref[...] = v


def spiking_neuron_layer(x, w, b, v_init=None, *, threshold=1.0, leak_factor=0.5,
                         time_steps=5, block_b=512, spike_dtype=jnp.bfloat16):
    """x: (B, in_features); w: (in_features, out_features); b: (out_features,).
    Returns (spikes (time_steps, B, out_features), final membrane potential (B, out))."""
    x = jnp.asarray(x, jnp.float32)
    w = jnp.asarray(w, jnp.float32)
    b = jnp.asarray(b, jnp.float32)
    batch, in_features = x.shape
    out_features = w.shape[1]
    if v_init is None:
        v_init = jnp.zeros((batch, out_features), jnp.float32)
    else:
        v_init = jnp.asarray(v_init, jnp.float32)

    # Tile the batch along the lane axis: multiples of 128 for dense vregs/stores.
    # Tiny batches collapse to a single tile (grid=(1,)).
    if batch <= block_b:
        blk = _round_up(max(batch, 1), 128)
    else:
        blk = _round_up(block_b, 128)
    bp = _round_up(batch, blk)
    grid = (bp // blk,)
    pad_b = bp - batch

    # Layout plumbing (once, outside the kernel): batch -> lanes.
    x_t = jnp.pad(x, ((0, pad_b), (0, 0))).T          # (in, bp)
    v_t = jnp.pad(v_init, ((0, pad_b), (0, 0))).T     # (out, bp)
    w_t = w.T                                         # (out, in)
    b2 = b.reshape(out_features, 1)                   # (out, 1)

    kernel = functools.partial(
        _spiking_layer_kernel,
        threshold=float(threshold),
        leak_factor=float(leak_factor),
        time_steps=int(time_steps),
    )

    spike_bytes = jnp.dtype(spike_dtype).itemsize
    cost = pl.CostEstimate(
        flops=int(2 * bp * in_features * out_features),
        transcendentals=0,
        bytes_accessed=int(
            4 * (bp * in_features + in_features * out_features + out_features
                 + 2 * bp * out_features)
            + time_steps * bp * out_features * spike_bytes),
    )

    spikes_t, v_out_t = pl.pallas_call(
        kernel,
        grid=grid,
        in_specs=[
            pl.BlockSpec((in_features, blk), lambda i: (0, i)),            # x tile (batch on lanes)
            pl.BlockSpec((out_features, in_features), lambda i: (0, 0)),   # W^T (VMEM-resident)
            pl.BlockSpec((out_features, 1), lambda i: (0, 0)),             # bias (resident)
            pl.BlockSpec((out_features, blk), lambda i: (0, i)),           # v_in tile
        ],
        out_specs=(
            pl.BlockSpec((time_steps, out_features, blk), lambda i: (0, 0, i)),  # spikes slab
            pl.BlockSpec((out_features, blk), lambda i: (0, i)),                 # v_out tile
        ),
        out_shape=(
            jax.ShapeDtypeStruct((time_steps, out_features, bp), spike_dtype),
            jax.ShapeDtypeStruct((out_features, bp), jnp.float32),
        ),
        compiler_params=pltpu.CompilerParams(
            dimension_semantics=("parallel",),   # batch tiles are independent (v7x: 2 TCs)
        ),
        cost_estimate=cost,
    )(x_t, w_t, b2, v_t)

    # Back to the PyTorch layout: (T, batch, out_features), (batch, out_features).
    spikes = jnp.transpose(spikes_t[:, :, :batch], (0, 2, 1))
    v_out = v_out_t[:, :batch].T
    return spikes, v_out


if __name__ == "__main__":
    key = jax.random.PRNGKey(0)
    kx, kw, kb = jax.random.split(key, 3)

    batch, in_features, out_features, time_steps = 200, 64, 32, 5
    x = jax.random.normal(kx, (batch, in_features), jnp.float32)
    # nn.Linear default init: U(-1/sqrt(in), 1/sqrt(in))
    bound = 1.0 / math.sqrt(in_features)
    w = jax.random.uniform(kw, (in_features, out_features), jnp.float32, -bound, bound)
    b = jax.random.uniform(kb, (out_features,), jnp.float32, -bound, bound)

    # block_b=128 -> padded batch 256, grid=(2,): exercises multi-tile + padding paths.
    spikes, v_final = spiking_neuron_layer(
        x, w, b, threshold=1.0, leak_factor=0.5, time_steps=time_steps, block_b=128)
    spikes = jax.block_until_ready(spikes)
    v_final = jax.block_until_ready(v_final)

    assert spikes.shape == (time_steps, batch, out_features), spikes.shape
    assert v_final.shape == (batch, out_features), v_final.shape

    # Pure-jnp reference; spikes are binary, allow a negligible fraction of
    # threshold-boundary flips due to matmul precision/ordering differences.
    current_ref = x @ w + b
    v = jnp.zeros((batch, out_features), jnp.float32)
    ref = []
    for _ in range(time_steps):
        v = v * 0.5 + current_ref
        s = (v >= 1.0).astype(jnp.float32)
        v = v * (1.0 - s)
        ref.append(s)
    ref = jnp.stack(ref, axis=0)
    mismatch = float(jnp.mean(jnp.abs(ref - spikes.astype(jnp.float32))))
    assert mismatch < 1e-2, f"spike mismatch fraction too high: {mismatch}"

    print("KERNEL_OK")
</pallas_src>

<mosaic_0001>
module attributes {stable_mosaic.version = 11 : i64} {
  func.func @_spiking_layer_kernel(%arg0: i32, %arg1: memref<64x128xf32, #tpu.memory_space<vmem>>, %arg2: memref<32x64xf32, #tpu.memory_space<vmem>>, %arg3: memref<32x1xf32, #tpu.memory_space<vmem>>, %arg4: memref<32x128xf32, #tpu.memory_space<vmem>>, %arg5: memref<5x32x128xbf16, #tpu.memory_space<vmem>>, %arg6: memref<32x128xf32, #tpu.memory_space<vmem>>) attributes {dimension_semantics = [#tpu.dimension_semantics<parallel>], iteration_bounds = array<i64: 2>, scalar_prefetch = 0 : i64, scratch_operands = 0 : i64, tpu.core_type = #tpu.core_type<tc>, window_params = [{transform_indices = @transform_0, window_bounds = array<i64: 64, 128>}, {pipeline_mode = #tpu.pipeline_mode<synchronous>, transform_indices = @transform_1, window_bounds = array<i64: 32, 64>}, {pipeline_mode = #tpu.pipeline_mode<synchronous>, transform_indices = @transform_2, window_bounds = array<i64: 32, 1>}, {transform_indices = @transform_3, window_bounds = array<i64: 32, 128>}, {transform_indices = @transform_4, window_bounds = array<i64: 5, 32, 128>}, {transform_indices = @transform_5, window_bounds = array<i64: 32, 128>}]} {
    %c0 = arith.constant 0 : index
    %c0_0 = arith.constant 0 : index
    %0 = vector.load %arg2[%c0, %c0_0] : memref<32x64xf32, #tpu.memory_space<vmem>>, vector<32x64xf32>
    %c0_1 = arith.constant 0 : index
    %c0_2 = arith.constant 0 : index
    %1 = vector.load %arg1[%c0_1, %c0_2] : memref<64x128xf32, #tpu.memory_space<vmem>>, vector<64x128xf32>
    %cst = arith.constant dense<0.000000e+00> : vector<32x128xf32>
    %2 = tpu.matmul %0, %1, %cst {dimension_numbers = #tpu.dot_dimension_numbers<[1], [0], [0], [1], [0, 0, 1, 1], [], []>} : vector<32x64xf32>, vector<64x128xf32>, vector<32x128xf32> -> vector<32x128xf32>
    %c0_3 = arith.constant 0 : index
    %c0_4 = arith.constant 0 : index
    %3 = vector.load %arg3[%c0_3, %c0_4] : memref<32x1xf32, #tpu.memory_space<vmem>>, vector<32x1xf32>
    %4 = vector.broadcast %3 : vector<32x1xf32> to vector<32x128xf32>
    %5 = arith.addf %2, %4 : vector<32x128xf32>
    %c0_5 = arith.constant 0 : index
    %c0_6 = arith.constant 0 : index
    %6 = vector.load %arg4[%c0_5, %c0_6] : memref<32x128xf32, #tpu.memory_space<vmem>>, vector<32x128xf32>
    %cst_7 = arith.constant 5.000000e-01 : f32
    %7 = vector.broadcast %cst_7 : f32 to vector<32x128xf32>
    %8 = arith.mulf %6, %7 : vector<32x128xf32>
    %9 = arith.addf %8, %5 : vector<32x128xf32>
    %cst_8 = arith.constant 1.000000e+00 : f32
    %10 = vector.broadcast %cst_8 : f32 to vector<32x128xf32>
    %11 = arith.cmpf oge, %9, %10 : vector<32x128xf32>
    %cst_9 = arith.constant 0.000000e+00 : f32
    %12 = vector.broadcast %cst_9 : f32 to vector<32x128xf32>
    %13 = arith.select %11, %12, %9 : vector<32x128xi1>, vector<32x128xf32>
    %14 = arith.extui %11 : vector<32x128xi1> to vector<32x128xi32>
    %15 = arith.sitofp %14 : vector<32x128xi32> to vector<32x128xf32>
    %16 = arith.truncf %15 : vector<32x128xf32> to vector<32x128xbf16>
    %cst_10 = arith.constant 5.000000e-01 : f32
    %17 = vector.broadcast %cst_10 : f32 to vector<32x128xf32>
    %18 = arith.mulf %13, %17 : vector<32x128xf32>
    %19 = arith.addf %18, %5 : vector<32x128xf32>
    %cst_11 = arith.constant 1.000000e+00 : f32
    %20 = vector.broadcast %cst_11 : f32 to vector<32x128xf32>
    %21 = arith.cmpf oge, %19, %20 : vector<32x128xf32>
    %cst_12 = arith.constant 0.000000e+00 : f32
    %22 = vector.broadcast %cst_12 : f32 to vector<32x128xf32>
    %23 = arith.select %21, %22, %19 : vector<32x128xi1>, vector<32x128xf32>
    %24 = arith.extui %21 : vector<32x128xi1> to vector<32x128xi32>
    %25 = arith.sitofp %24 : vector<32x128xi32> to vector<32x128xf32>
    %26 = arith.truncf %25 : vector<32x128xf32> to vector<32x128xbf16>
    %cst_13 = arith.constant 5.000000e-01 : f32
    %27 = vector.broadcast %cst_13 : f32 to vector<32x128xf32>
    %28 = arith.mulf %23, %27 : vector<32x128xf32>
    %29 = arith.addf %28, %5 : vector<32x128xf32>
    %cst_14 = arith.constant 1.000000e+00 : f32
    %30 = vector.broadcast %cst_14 : f32 to vector<32x128xf32>
    %31 = arith.cmpf oge, %29, %30 : vector<32x128xf32>
    %cst_15 = arith.constant 0.000000e+00 : f32
    %32 = vector.broadcast %cst_15 : f32 to vector<32x128xf32>
    %33 = arith.select %31, %32, %29 : vector<32x128xi1>, vector<32x128xf32>
    %34 = arith.extui %31 : vector<32x128xi1> to vector<32x128xi32>
    %35 = arith.sitofp %34 : vector<32x128xi32> to vector<32x128xf32>
    %36 = arith.truncf %35 : vector<32x128xf32> to vector<32x128xbf16>
    %cst_16 = arith.constant 5.000000e-01 : f32
    %37 = vector.broadcast %cst_16 : f32 to vector<32x128xf32>
    %38 = arith.mulf %33, %37 : vector<32x128xf32>
    %39 = arith.addf %38, %5 : vector<32x128xf32>
    %cst_17 = arith.constant 1.000000e+00 : f32
    %40 = vector.broadcast %cst_17 : f32 to vector<32x128xf32>
    %41 = arith.cmpf oge, %39, %40 : vector<32x128xf32>
    %cst_18 = arith.constant 0.000000e+00 : f32
    %42 = vector.broadcast %cst_18 : f32 to vector<32x128xf32>
    %43 = arith.select %41, %42, %39 : vector<32x128xi1>, vector<32x128xf32>
    %44 = arith.extui %41 : vector<32x128xi1> to vector<32x128xi32>
    %45 = arith.sitofp %44 : vector<32x128xi32> to vector<32x128xf32>
    %46 = arith.truncf %45 : vector<32x128xf32> to vector<32x128xbf16>
    %cst_19 = arith.constant 5.000000e-01 : f32
    %47 = vector.broadcast %cst_19 : f32 to vector<32x128xf32>
    %48 = arith.mulf %43, %47 : vector<32x128xf32>
    %49 = arith.addf %48, %5 : vector<32x128xf32>
    %cst_20 = arith.constant 1.000000e+00 : f32
    %50 = vector.broadcast %cst_20 : f32 to vector<32x128xf32>
    %51 = arith.cmpf oge, %49, %50 : vector<32x128xf32>
    %cst_21 = arith.constant 0.000000e+00 : f32
    %52 = vector.broadcast %cst_21 : f32 to vector<32x128xf32>
    %53 = arith.select %51, %52, %49 : vector<32x128xi1>, vector<32x128xf32>
    %54 = arith.extui %51 : vector<32x128xi1> to vector<32x128xi32>
    %55 = arith.sitofp %54 : vector<32x128xi32> to vector<32x128xf32>
    %56 = arith.truncf %55 : vector<32x128xf32> to vector<32x128xbf16>
    %57 = vector.shape_cast %16 : vector<32x128xbf16> to vector<1x32x128xbf16>
    %58 = vector.shape_cast %26 : vector<32x128xbf16> to vector<1x32x128xbf16>
    %59 = vector.shape_cast %36 : vector<32x128xbf16> to vector<1x32x128xbf16>
    %60 = vector.shape_cast %46 : vector<32x128xbf16> to vector<1x32x128xbf16>
    %61 = vector.shape_cast %56 : vector<32x128xbf16> to vector<1x32x128xbf16>
    %62 = tpu.concatenate %57, %58, %59, %60, %61 in 0 : vector<1x32x128xbf16>, vector<1x32x128xbf16>, vector<1x32x128xbf16>, vector<1x32x128xbf16>, vector<1x32x128xbf16> -> vector<5x32x128xbf16>
    %c0_22 = arith.constant 0 : index
    %c0_23 = arith.constant 0 : index
    %c0_24 = arith.constant 0 : index
    %63 = vector.load %arg5[%c0_22, %c0_23, %c0_24] : memref<5x32x128xbf16, #tpu.memory_space<vmem>>, vector<5x32x128xbf16>
    tpu.vector_store %arg5[%c0_22, %c0_23, %c0_24], %62 {strides = array<i32>} : memref<5x32x128xbf16, #tpu.memory_space<vmem>>, vector<5x32x128xbf16>,
    %c0_25 = arith.constant 0 : index
    %c0_26 = arith.constant 0 : index
    %64 = vector.load %arg6[%c0_25, %c0_26] : memref<32x128xf32, #tpu.memory_space<vmem>>, vector<32x128xf32>
    tpu.vector_store %arg6[%c0_25, %c0_26], %53 {strides = array<i32>} : memref<32x128xf32, #tpu.memory_space<vmem>>, vector<32x128xf32>,
    return
  }
  func.func @transform_0(%arg0: i32) -> (i32, i32) {
    %c0_i32 = arith.constant 0 : i32
    %c0_i32_0 = arith.constant 0 : i32
    return %c0_i32, %arg0 : i32, i32
  }
  func.func @transform_1(%arg0: i32) -> (i32, i32) {
    %c0_i32 = arith.constant 0 : i32
    %c0_i32_0 = arith.constant 0 : i32
    %c0_i32_1 = arith.constant 0 : i32
    return %c0_i32, %c0_i32_0 : i32, i32
  }
  func.func @transform_2(%arg0: i32) -> (i32, i32) {
    %c0_i32 = arith.constant 0 : i32
    %c0_i32_0 = arith.constant 0 : i32
    %c0_i32_1 = arith.constant 0 : i32
    return %c0_i32, %c0_i32_0 : i32, i32
  }
  func.func @transform_3(%arg0: i32) -> (i32, i32) {
    %c0_i32 = arith.constant 0 : i32
    %c0_i32_0 = arith.constant 0 : i32
    return %c0_i32, %arg0 : i32, i32
  }
  func.func @transform_4(%arg0: i32) -> (i32, i32, i32) {
    %c0_i32 = arith.constant 0 : i32
    %c0_i32_0 = arith.constant 0 : i32
    %c0_i32_1 = arith.constant 0 : i32
    return %c0_i32, %c0_i32_0, %arg0 : i32, i32, i32
  }
  func.func @transform_5(%arg0: i32) -> (i32, i32) {
    %c0_i32 = arith.constant 0 : i32
    %c0_i32_0 = arith.constant 0 : i32
    return %c0_i32, %arg0 : i32, i32
  }
}

</mosaic_0001>

<llo_original>
// kernel: tpu_custom_call.1
$region0: #{tpu_custom_call.1}
  #allocation0 [shape = 'u32[]', space=smem, size = 0x4, offset = 0x4, fixed_abs, tag = 'smem constant byte address 0x4 - core index']
  #allocation1 [shape = 'u32[72,128]{1,0:T(1,128)}', space=vmem, size = 0x9000, scoped, tag = 'internal scratch']
  %s0 = inlined_call_operand.hbm [shape: f32[64,256], index: 0, kind: input, shape index: {}]
  %s1 = inlined_call_operand.vmem [shape: f32[32,64], index: 1, kind: input, shape index: {}]
  %s2 = inlined_call_operand.vmem [shape: f32[32,1], index: 2, kind: input, shape index: {}]
  %s3 = inlined_call_operand.hbm [shape: f32[32,256], index: 3, kind: input, shape index: {}]
  %s4 = inlined_call_operand.hbm [shape: bf16[5,32,256], index: 4, kind: output, shape index: {0}]
  %s5 = inlined_call_operand.hbm [shape: f32[32,256], index: 5, kind: output, shape index: {1}]
  %6 = xla_tuple %s4, %s5
  %s7 = sld [smem:[#allocation0]]
  $region65: #{tpu_custom_call.1} parent=0
    _
  %s9 = ssub.s32 1, %s7
  %s10 = scalar_select 0, %s9, %s7
  $region1: #{tpu_custom_call.1} parent=0
    #allocation2 [shape = 'u8[65536]{0}', space=vmem, size = 0x10000, scoped, tag = 'input window, operand 0']
    #allocation3 [shape = 's32[2]{0}', space=sflag, size = 0x8, scoped, tag = 'scoped memory for tpu_custom_call.1']
    #allocation4 [shape = 's32[2]{0}', space=sflag, size = 0x8, scoped, tag = 'scoped memory for tpu_custom_call.1']
    #allocation5 [shape = 'u8[32768]{0}', space=vmem, size = 0x8000, scoped, tag = 'input window, operand 3']
    #allocation6 [shape = 's32[2]{0}', space=sflag, size = 0x8, scoped, tag = 'scoped memory for tpu_custom_call.1']
    #allocation7 [shape = 'u8[81920]{0}', space=vmem, size = 0x14000, scoped, tag = 'output window, operand 0']
    #allocation8 [shape = 'u8[32768]{0}', space=vmem, size = 0x8000, scoped, tag = 'output window, operand 1']
    #allocation9 [shape = 's32[2]{0}', space=sflag, size = 0x8, scoped, tag = 'scoped memory for tpu_custom_call.1']
    %11 = vsyncpa [#allocation3], 0
    %s12 = scalar_lea.sflag [#allocation3], 1
    %13 = vsyncpa %s12, 0
    %14 = vsyncpa [#allocation6], 0
    %s15 = scalar_lea.sflag [#allocation6], 1
    %16 = vsyncpa %s15, 0
    %17 = vsyncpa [#allocation4], 0
    %s18 = scalar_lea.sflag [#allocation4], 1
    %19 = vsyncpa %s18, 0
    %20 = vsyncpa [#allocation9], 0
    %s21 = scalar_lea.sflag [#allocation9], 1
    %22 = vsyncpa %s21, 0
    loop: start=0, step=1, limit=4
    $region2: #{tpu_custom_call.1} parent=1 // loop_pre_header
      _
    $region3: #{tpu_custom_call.1} parent=1 // loop_header
      %s24 = sphi 0, %s28
      %p25 = scmp.ge.s32.totalorder %s24, 4
      %s34 = sphi 0, %s36
      %s37 = sphi 0, %s34
      %s38 = sphi 0, %s37
      %s54 = sphi 0, %s38
      %s58 = sphi 0, %s58
      %s60 = sphi 0, %s58
      %s61 = sphi 0, %s60
      %s75 = sphi 0, %s61
      %s79 = sphi 0, %s79
      %s81 = sphi 0, %s79
      %s82 = sphi 0, %s81
      %s96 = sphi 0, %s82
      %s102 = sphi 0, %s104
      %s105 = sphi 0, %s102
      %s106 = sphi 0, %s105
      %s122 = sphi 0, %s106
      %s128 = sphi 0, %s130
      %s131 = sphi 0, %s128
      %s132 = sphi 0, %s131
      %s148 = sphi 0, %s132
      %s154 = sphi 0, %s156
      %s157 = sphi 0, %s154
      %s158 = sphi 0, %s157
      %s174 = sphi 0, %s158
    $region4: #{tpu_custom_call.1} parent=1 // loop_header_branch
      %27 = sbr.rel (%p25) target = $region8
    $region5: #{tpu_custom_call.1} parent=1 // loop_body
      %s29 = ssub.s32 %s24, 1
      %s30 = ssub.s32 %s24, 2
      %s31 = sadd.s32 %s24, 1
      %s32 = ssub.s32 %s24, %s31
      %p33 = scmp.eq.s32.totalorder %s32, 0
      %s35 = sadd.s32 %s34, 1
      %s36 = scalar_select %p33, %s34, %s35
      %p39 = pneg %p33
      %p40 = scmp.eq.s32.totalorder %s24, 1
      %p41 = por %p39, %p40
      %p42 = scmp.ne.s32.totalorder %s34, %s37
      %p43 = scmp.eq.s32.totalorder %s24, 0
      %p44 = por %p42, %p43
      %p45 = scmp.ne.s32.totalorder %s34, %s37
      %p46 = scmp.eq.s32.totalorder %s29, 1
      %p47 = por %p45, %p46
      %p48 = scmp.ne.s32.totalorder %s37, %s38
      %p49 = scmp.eq.s32.totalorder %s29, 0
      %p50 = por %p48, %p49
      %p51 = scmp.ne.s32.totalorder %s37, %s38
      %p52 = scmp.eq.s32.totalorder %s30, 1
      %p53 = por %p51, %p52
      %p55 = scmp.ne.s32.totalorder %s38, %s54
      %p56 = scmp.eq.s32.totalorder %s30, 0
      %p57 = por %p55, %p56
      %s59 = sadd.s32 %s58, 1
      %p62 = scmp.eq.s32.totalorder %s24, 1
      %p63 = scmp.ne.s32.totalorder %s58, %s60
      %p64 = scmp.eq.s32.totalorder %s24, 0
      %p65 = por %p63, %p64
      %p66 = scmp.ne.s32.totalorder %s58, %s60
      %p67 = scmp.eq.s32.totalorder %s29, 1
      %p68 = por %p66, %p67
      %p69 = scmp.ne.s32.totalorder %s60, %s61
      %p70 = scmp.eq.s32.totalorder %s29, 0
      %p71 = por %p69, %p70
      %p72 = scmp.ne.s32.totalorder %s60, %s61
      %p73 = scmp.eq.s32.totalorder %s30, 1
      %p74 = por %p72, %p73
      %p76 = scmp.ne.s32.totalorder %s61, %s75
      %p77 = scmp.eq.s32.totalorder %s30, 0
      %p78 = por %p76, %p77
      %s80 = sadd.s32 %s79, 1
      %p83 = scmp.eq.s32.totalorder %s24, 1
      %p84 = scmp.ne.s32.totalorder %s79, %s81
      %p85 = scmp.eq.s32.totalorder %s24, 0
      %p86 = por %p84, %p85
      %p87 = scmp.ne.s32.totalorder %s79, %s81
      %p88 = scmp.eq.s32.totalorder %s29, 1
      %p89 = por %p87, %p88
      %p90 = scmp.ne.s32.totalorder %s81, %s82
      %p91 = scmp.eq.s32.totalorder %s29, 0
      %p92 = por %p90, %p91
      %p93 = scmp.ne.s32.totalorder %s81, %s82
      %p94 = scmp.eq.s32.totalorder %s30, 1
      %p95 = por %p93, %p94
      %p97 = scmp.ne.s32.totalorder %s82, %s96
      %p98 = scmp.eq.s32.totalorder %s30, 0
      %p99 = por %p97, %p98
      %s100 = ssub.s32 %s24, %s31
      %p101 = scmp.eq.s32.totalorder %s100, 0
      %s103 = sadd.s32 %s102, 1
      %s104 = scalar_select %p101, %s102, %s103
      %p107 = pneg %p101
      %p108 = scmp.eq.s32.totalorder %s24, 1
      %p109 = por %p107, %p108
      %p110 = scmp.ne.s32.totalorder %s102, %s105
      %p111 = scmp.eq.s32.totalorder %s24, 0
      %p112 = por %p110, %p111
      %p113 = scmp.ne.s32.totalorder %s102, %s105
      %p114 = scmp.eq.s32.totalorder %s29, 1
      %p115 = por %p113, %p114
      %p116 = scmp.ne.s32.totalorder %s105, %s106
      %p117 = scmp.eq.s32.totalorder %s29, 0
      %p118 = por %p116, %p117
      %p119 = scmp.ne.s32.totalorder %s105, %s106
      %p120 = scmp.eq.s32.totalorder %s30, 1
      %p121 = por %p119, %p120
      %p123 = scmp.ne.s32.totalorder %s106, %s122
      %p124 = scmp.eq.s32.totalorder %s30, 0
      %p125 = por %p123, %p124
      %s126 = ssub.s32 %s24, %s31
      %p127 = scmp.eq.s32.totalorder %s126, 0
      %s129 = sadd.s32 %s128, 1
      %s130 = scalar_select %p127, %s128, %s129
      %p133 = pneg %p127
      %p134 = scmp.eq.s32.totalorder %s24, 1
      %p135 = por %p133, %p134
      %p136 = scmp.ne.s32.totalorder %s128, %s131
      %p137 = scmp.eq.s32.totalorder %s24, 0
      %p138 = por %p136, %p137
      %p139 = scmp.ne.s32.totalorder %s128, %s131
      %p140 = scmp.eq.s32.totalorder %s29, 1
      %p141 = por %p139, %p140
      %p142 = scmp.ne.s32.totalorder %s131, %s132
      %p143 = scmp.eq.s32.totalorder %s29, 0
      %p144 = por %p142, %p143
      %p145 = scmp.ne.s32.totalorder %s131, %s132
      %p146 = scmp.eq.s32.totalorder %s30, 1
      %p147 = por %p145, %p146
      %p149 = scmp.ne.s32.totalorder %s132, %s148
      %p150 = scmp.eq.s32.totalorder %s30, 0
      %p151 = por %p149, %p150
      %s152 = ssub.s32 %s24, %s31
      %p153 = scmp.eq.s32.totalorder %s152, 0
      %s155 = sadd.s32 %s154, 1
      %s156 = scalar_select %p153, %s154, %s155
      %p159 = pneg %p153
      %p160 = scmp.eq.s32.totalorder %s24, 1
      %p161 = por %p159, %p160
      %p162 = scmp.ne.s32.totalorder %s154, %s157
      %p163 = scmp.eq.s32.totalorder %s24, 0
      %p164 = por %p162, %p163
      %p165 = scmp.ne.s32.totalorder %s154, %s157
      %p166 = scmp.eq.s32.totalorder %s29, 1
      %p167 = por %p165, %p166
      %p168 = scmp.ne.s32.totalorder %s157, %s158
      %p169 = scmp.eq.s32.totalorder %s29, 0
      %p170 = por %p168, %p169
      %p171 = scmp.ne.s32.totalorder %s157, %s158
      %p172 = scmp.eq.s32.totalorder %s30, 1
      %p173 = por %p171, %p172
      %p175 = scmp.ne.s32.totalorder %s158, %s174
      %p176 = scmp.eq.s32.totalorder %s30, 0
      %p177 = por %p175, %p176
      %p178 = scmp.le.s32.totalorder 1, %s24
      %p179 = scmp.lt.s32.totalorder %s24, 3
      %p180 = pnand %p178, %p179
      %p181 = pneg %p180
      // Predicated region
      $region9: #{tpu_custom_call.1} parent=5 // pred_check
        _
      $region10: #{tpu_custom_call.1} parent=5 // pred_check_branch
        %183 = sbr.rel (%p180) target = $region12
      $region11: #{tpu_custom_call.1} parent=5 // pred_region
        %s184 = ssub.s32 %s24, 1
        // Predicated region
        $region13: #{tpu_custom_call.1} parent=11 // pred_check
          %p185 = pneg %p71
        $region14: #{tpu_custom_call.1} parent=11 // pred_check_branch
          %187 = sbr.rel (%p185) target = $region16
        $region15: #{tpu_custom_call.1} parent=11 // pred_region
          _
        $region16: #{tpu_custom_call.1} parent=11 // pred_fallthru
          _
        // Predicated region
        $region17: #{tpu_custom_call.1} parent=11 // pred_check
          %p188 = pneg %p92
        $region18: #{tpu_custom_call.1} parent=11 // pred_check_branch
          %190 = sbr.rel (%p188) target = $region20
        $region19: #{tpu_custom_call.1} parent=11 // pred_region
          _
        $region20: #{tpu_custom_call.1} parent=11 // pred_fallthru
          _
      $region12: #{tpu_custom_call.1} parent=5 // pred_fallthru
        _
      %p191 = scmp.lt.s32.totalorder %s24, 2
      // Predicated region
      $region21: #{tpu_custom_call.1} parent=5 // pred_check
        %p192 = pneg %p191
      $region22: #{tpu_custom_call.1} parent=5 // pred_check_branch
        %194 = sbr.rel (%p192) target = $region24
      $region23: #{tpu_custom_call.1} parent=5 // pred_region
        // Predicated region
        $region25: #{tpu_custom_call.1} parent=23 // pred_check
          %p195 = pneg %p44
        $region26: #{tpu_custom_call.1} parent=23 // pred_check_branch
          %197 = sbr.rel (%p195) target = $region28
        $region27: #{tpu_custom_call.1} parent=23 // pred_region
          %s198 = sand.u32 %s34, 1
          %s199 = scalar_lea.sflag [#allocation3], %s198
          %s200 = sand.u32 %s34, 1
          %s201 = smul.addr %s200, 64
          %s202 = scalar_lea.vmem [#allocation2], %s201
          %204 = vsyncadd %s199, 0
          %s205 = smul.addr %s24, 8
          %s206 = scalar_lea.hbm %s0, %s205
          %s207 = sshll.u32 %s206, 4
          %s208 = int_to_ptr.hbm [resolvable:$true] %s207
          %s209 = sshll.u32 %s202, 4
          %s210 = int_to_ptr.vmem [resolvable:$true] %s209
          %215 = dma.hbm_to_vmem [thread:$0]  %s208, 1024, %s210, %s199, 256, 128, 8
        $region28: #{tpu_custom_call.1} parent=23 // pred_fallthru
          _
        // Predicated region
        $region29: #{tpu_custom_call.1} parent=23 // pred_check
          %p216 = pneg %p112
        $region30: #{tpu_custom_call.1} parent=23 // pred_check_branch
          %218 = sbr.rel (%p216) target = $region32
        $region31: #{tpu_custom_call.1} parent=23 // pred_region
          %s219 = sand.u32 %s102, 1
          %s220 = scalar_lea.sflag [#allocation6], %s219
          %s221 = sand.u32 %s102, 1
          %s222 = smul.addr %s221, 32
          %s223 = scalar_lea.vmem [#allocation5], %s222
          %225 = vsyncadd %s220, 0
          %s226 = smul.addr %s24, 8
          %s227 = scalar_lea.hbm %s3, %s226
          %s228 = sshll.u32 %s227, 4
          %s229 = int_to_ptr.hbm [resolvable:$true] %s228
          %s230 = sshll.u32 %s223, 4
          %s231 = int_to_ptr.vmem [resolvable:$true] %s230
          %236 = dma.hbm_to_vmem [thread:$0]  %s229, 512, %s231, %s220, 256, 128, 8
        $region32: #{tpu_custom_call.1} parent=23 // pred_fallthru
          _
      $region24: #{tpu_custom_call.1} parent=5 // pred_fallthru
        _
      %p237 = scmp.le.s32.totalorder 1, %s24
      %p238 = scmp.lt.s32.totalorder %s24, 3
      %p239 = pnand %p237, %p238
      %p240 = pneg %p239
      // Predicated region
      $region33: #{tpu_custom_call.1} parent=5 // pred_check
        _
      $region34: #{tpu_custom_call.1} parent=5 // pred_check_branch
        %242 = sbr.rel (%p239) target = $region36
      $region35: #{tpu_custom_call.1} parent=5 // pred_region
        %s243 = ssub.s32 %s24, 1
        %s244 = sand.u32 %s37, 1
        %s245 = scalar_lea.sflag [#allocation3], %s244
        %s246 = sand.u32 %s37, 1
        %s247 = smul.addr %s246, 64
        %s248 = scalar_lea.vmem [#allocation2], %s247
        // Predicated region
        $region37: #{tpu_custom_call.1} parent=35 // pred_check
          %p249 = pneg %p50
        $region38: #{tpu_custom_call.1} parent=35 // pred_check_branch
          %251 = sbr.rel (%p249) target = $region40
        $region39: #{tpu_custom_call.1} parent=35 // pred_region
          %253 = dma.done %s245, 1024
        $region40: #{tpu_custom_call.1} parent=35 // pred_fallthru
          _
        %s254 = sand.u32 %s105, 1
        %s255 = scalar_lea.sflag [#allocation6], %s254
        %s256 = sand.u32 %s105, 1
        %s257 = smul.addr %s256, 32
        %s258 = scalar_lea.vmem [#allocation5], %s257
        // Predicated region
        $region41: #{tpu_custom_call.1} parent=35 // pred_check
          %p259 = pneg %p118
        $region42: #{tpu_custom_call.1} parent=35 // pred_check_branch
          %261 = sbr.rel (%p259) target = $region44
        $region43: #{tpu_custom_call.1} parent=35 // pred_region
          %263 = dma.done %s255, 512
        $region44: #{tpu_custom_call.1} parent=35 // pred_fallthru
          _
        %s264 = sand.u32 %s37, 1
        %s265 = scalar_lea.sflag [#allocation3], %s264
        %s266 = sand.u32 %s37, 1
        %s267 = smul.addr %s266, 64
        %s268 = scalar_lea.vmem [#allocation2], %s267
        %p269 = pneg %p50
        %p270 = pneg %p47
        %p271 = pneg %p71
        %p272 = pneg %p68
        %p273 = pneg %p92
        %p274 = pneg %p89
        %s275 = sand.u32 %s105, 1
        %s276 = scalar_lea.sflag [#allocation6], %s275
        %s277 = sand.u32 %s105, 1
        %s278 = smul.addr %s277, 32
        %s279 = scalar_lea.vmem [#allocation5], %s278
        %p280 = pneg %p118
        %p281 = pneg %p115
        %p282 = pneg %p144
        %p283 = pneg %p141
        %s284 = sand.u32 %s131, 1
        %s285 = scalar_lea.sflag [#allocation4], %s284
        %s286 = sand.u32 %s131, 1
        %s287 = smul.addr %s286, 80
        %s288 = scalar_lea.vmem [#allocation7], %s287
        %p289 = pneg %p170
        %p290 = pneg %p167
        %s291 = sand.u32 %s157, 1
        %s292 = scalar_lea.sflag [#allocation9], %s291
        %s293 = sand.u32 %s157, 1
        %s294 = smul.addr %s293, 32
        %s295 = scalar_lea.vmem [#allocation8], %s294
        %v296 = vld [vmem:[%s1] sm:$0xff]
        %v297 = vld [vmem:[%s1 + $0x8] sm:$0xff]
        %v298 = vld [vmem:[%s1 + $0x10] sm:$0xff]
        %v299 = vld [vmem:[%s1 + $0x18] sm:$0xff]
        %v300 = vld [vmem:[%s248] sm:$0xff]
        %v301 = vld [vmem:[%s248 + $0x8] sm:$0xff]
        %v302 = vld [vmem:[%s248 + $0x10] sm:$0xff]
        %v303 = vld [vmem:[%s248 + $0x18] sm:$0xff]
        %v304 = vld [vmem:[%s248 + $0x20] sm:$0xff]
        %v305 = vld [vmem:[%s248 + $0x28] sm:$0xff]
        %v306 = vld [vmem:[%s248 + $0x30] sm:$0xff]
        %v307 = vld [vmem:[%s248 + $0x38] sm:$0xff]
        %v308 = vld [vmem:[%s2] sm:$0xff]
        %v309 = vld [vmem:[%s2 + $0x8] sm:$0xff]
        %v310 = vld [vmem:[%s2 + $0x10] sm:$0xff]
        %v311 = vld [vmem:[%s2 + $0x18] sm:$0xff]
        %313 = vset.pattern.permute.xlu0 0
        %314 = vperm.xlu0 %313, %v308
        %v315 = vpop.permute.xlu0 %314
        %318 = vset.pattern.permute.xlu0 0
        %319 = vperm.xlu0 %318, %v309
        %v320 = vpop.permute.xlu0 %319
        %323 = vset.pattern.permute.xlu0 0
        %324 = vperm.xlu0 %323, %v310
        %v325 = vpop.permute.xlu0 %324
        %328 = vset.pattern.permute.xlu0 0
        %329 = vperm.xlu0 %328, %v311
        %v330 = vpop.permute.xlu0 %329
        %vm332 = vcmask 523264
        %v334 = vsel %vm332, %v296, 0
        %v337 = vsel %vm332, %v297, 0
        %v340 = vsel %vm332, %v298, 0
        %v343 = vsel %vm332, %v299, 0
        %345 = vmatpush.msra.mxu0 0.0
        %346 = vmatpush.msra.mxu0 0.0
        %347 = vmatpush.msra.mxu0 0.0
        %348 = vmatpush.msra.mxu0 0.0
        %349 = vmatpush.msra.mxu0 0.0
        %350 = vmatpush.msra.mxu0 0.0
        %351 = vmatpush.msra.mxu0 0.0
        %352 = vmatpush.msra.mxu0 0.0
        %353 = vmatpush.msra.mxu0 %v307
        %354 = vmatpush.msra.mxu0 %v306
        %355 = vmatpush.msra.mxu0 %v305
        %356 = vmatpush.msra.mxu0 %v304
        %357 = vmatpush.msra.mxu0 %v303
        %358 = vmatpush.msra.mxu0 %v302
        %359 = vmatpush.msra.mxu0 %v301
        %360 = vmatpush.msra.mxu0 %v300
        %361 = vmatmul.f32.gmra.mxu0 %v334
        %v362 = vpop.f32.mrf.mxu0
        %v363 = vadd.f32 %v315, %v362
        %364 = vmatmul.f32.gmra.mxu0 %v337
        %v365 = vpop.f32.mrf.mxu0
        %v366 = vadd.f32 %v320, %v365
        %367 = vmatmul.f32.gmra.mxu0 %v340
        %v368 = vpop.f32.mrf.mxu0
        %v369 = vadd.f32 %v325, %v368
        %370 = vmatmul.f32.gmra.mxu0 %v343
        %v371 = vpop.f32.mrf.mxu0
        %v372 = vadd.f32 %v330, %v371
        %373 = vdwg.mxu0
        %v374 = vld [vmem:[%s258] sm:$0xff]
        %v375 = vld [vmem:[%s258 + $0x8] sm:$0xff]
        %v376 = vld [vmem:[%s258 + $0x10] sm:$0xff]
        %v377 = vld [vmem:[%s258 + $0x18] sm:$0xff]
        %v378 = vmul.f32 %v374, 0.5
        %v379 = vmul.f32 %v375, 0.5
        %v380 = vmul.f32 %v376, 0.5
        %v381 = vmul.f32 %v377, 0.5
        %v382 = vadd.f32 %v378, %v363
        %v383 = vadd.f32 %v379, %v366
        %v384 = vadd.f32 %v380, %v369
        %v385 = vadd.f32 %v381, %v372
        %vm386 = vcmp.ge.f32.partialorder %v382, 1.0
        %vm387 = vcmp.ge.f32.partialorder %v383, 1.0
        %vm388 = vcmp.ge.f32.partialorder %v384, 1.0
        %vm389 = vcmp.ge.f32.partialorder %v385, 1.0
        %v390 = vsel %vm386, 0.0, %v382
        %v391 = vsel %vm387, 0.0, %v383
        %v392 = vsel %vm388, 0.0, %v384
        %v393 = vsel %vm389, 0.0, %v385
        %v394 = vsel %vm386, 1, 0
        %v395 = vsel %vm387, 1, 0
        %v396 = vsel %vm388, 1, 0
        %v397 = vsel %vm389, 1, 0
        %v398 = vcvt.s32.f32 %v394
        %v399 = vcvt.s32.f32 %v395
        %v400 = vcvt.s32.f32 %v396
        %v401 = vcvt.s32.f32 %v397
        %v402 = vpack.c.bf16 %v398, %v398
        %v403 = vpack.c.bf16 %v399, %v399
        %v404 = vpack.c.bf16 %v400, %v400
        %v405 = vpack.c.bf16 %v401, %v401
        %v406 = vmul.f32 %v390, 0.5
        %v407 = vmul.f32 %v391, 0.5
        %v408 = vmul.f32 %v392, 0.5
        %v409 = vmul.f32 %v393, 0.5
        %v410 = vadd.f32 %v406, %v363
        %v411 = vadd.f32 %v407, %v366
        %v412 = vadd.f32 %v408, %v369
        %v413 = vadd.f32 %v409, %v372
        %vm414 = vcmp.ge.f32.partialorder %v410, 1.0
        %vm415 = vcmp.ge.f32.partialorder %v411, 1.0
        %vm416 = vcmp.ge.f32.partialorder %v412, 1.0
        %vm417 = vcmp.ge.f32.partialorder %v413, 1.0
        %v418 = vsel %vm414, 0.0, %v410
        %v419 = vsel %vm415, 0.0, %v411
        %v420 = vsel %vm416, 0.0, %v412
        %v421 = vsel %vm417, 0.0, %v413
        %v422 = vsel %vm414, 1, 0
        %v423 = vsel %vm415, 1, 0
        %v424 = vsel %vm416, 1, 0
        %v425 = vsel %vm417, 1, 0
        %v426 = vcvt.s32.f32 %v422
        %v427 = vcvt.s32.f32 %v423
        %v428 = vcvt.s32.f32 %v424
        %v429 = vcvt.s32.f32 %v425
        %v430 = vpack.c.bf16 %v426, %v426
        %v431 = vpack.c.bf16 %v427, %v427
        %v432 = vpack.c.bf16 %v428, %v428
        %v433 = vpack.c.bf16 %v429, %v429
        %v434 = vmul.f32 %v418, 0.5
        %v435 = vmul.f32 %v419, 0.5
        %v436 = vmul.f32 %v420, 0.5
        %v437 = vmul.f32 %v421, 0.5
        %v438 = vadd.f32 %v434, %v363
        %v439 = vadd.f32 %v435, %v366
        %v440 = vadd.f32 %v436, %v369
        %v441 = vadd.f32 %v437, %v372
        %vm442 = vcmp.ge.f32.partialorder %v438, 1.0
        %vm443 = vcmp.ge.f32.partialorder %v439, 1.0
        %vm444 = vcmp.ge.f32.partialorder %v440, 1.0
        %vm445 = vcmp.ge.f32.partialorder %v441, 1.0
        %v446 = vsel %vm442, 0.0, %v438
        %v447 = vsel %vm443, 0.0, %v439
        %v448 = vsel %vm444, 0.0, %v440
        %v449 = vsel %vm445, 0.0, %v441
        %v450 = vsel %vm442, 1, 0
        %v451 = vsel %vm443, 1, 0
        %v452 = vsel %vm444, 1, 0
        %v453 = vsel %vm445, 1, 0
        %v454 = vcvt.s32.f32 %v450
        %v455 = vcvt.s32.f32 %v451
        %v456 = vcvt.s32.f32 %v452
        %v457 = vcvt.s32.f32 %v453
        %v458 = vpack.c.bf16 %v454, %v454
        %v459 = vpack.c.bf16 %v455, %v455
        %v460 = vpack.c.bf16 %v456, %v456
        %v461 = vpack.c.bf16 %v457, %v457
        %v462 = vmul.f32 %v446, 0.5
        %v463 = vmul.f32 %v447, 0.5
        %v464 = vmul.f32 %v448, 0.5
        %v465 = vmul.f32 %v449, 0.5
        %v466 = vadd.f32 %v462, %v363
        %v467 = vadd.f32 %v463, %v366
        %v468 = vadd.f32 %v464, %v369
        %v469 = vadd.f32 %v465, %v372
        %vm470 = vcmp.ge.f32.partialorder %v466, 1.0
        %vm471 = vcmp.ge.f32.partialorder %v467, 1.0
        %vm472 = vcmp.ge.f32.partialorder %v468, 1.0
        %vm473 = vcmp.ge.f32.partialorder %v469, 1.0
        %v474 = vsel %vm470, 0.0, %v466
        %v475 = vsel %vm471, 0.0, %v467
        %v476 = vsel %vm472, 0.0, %v468
        %v477 = vsel %vm473, 0.0, %v469
        %v478 = vsel %vm470, 1, 0
        %v479 = vsel %vm471, 1, 0
        %v480 = vsel %vm472, 1, 0
        %v481 = vsel %vm473, 1, 0
        %v482 = vcvt.s32.f32 %v478
        %v483 = vcvt.s32.f32 %v479
        %v484 = vcvt.s32.f32 %v480
        %v485 = vcvt.s32.f32 %v481
        %v486 = vpack.c.bf16 %v482, %v482
        %v487 = vpack.c.bf16 %v483, %v483
        %v488 = vpack.c.bf16 %v484, %v484
        %v489 = vpack.c.bf16 %v485, %v485
        %v490 = vmul.f32 %v474, 0.5
        %v491 = vmul.f32 %v475, 0.5
        %v492 = vmul.f32 %v476, 0.5
        %v493 = vmul.f32 %v477, 0.5
        %v494 = vadd.f32 %v490, %v363
        %v495 = vadd.f32 %v491, %v366
        %v496 = vadd.f32 %v492, %v369
        %v497 = vadd.f32 %v493, %v372
        %vm498 = vcmp.ge.f32.partialorder %v494, 1.0
        %vm499 = vcmp.ge.f32.partialorder %v495, 1.0
        %vm500 = vcmp.ge.f32.partialorder %v496, 1.0
        %vm501 = vcmp.ge.f32.partialorder %v497, 1.0
        %v502 = vsel %vm498, 0.0, %v494
        %v503 = vsel %vm499, 0.0, %v495
        %v504 = vsel %vm500, 0.0, %v496
        %v505 = vsel %vm501, 0.0, %v497
        %v506 = vsel %vm498, 1, 0
        %v507 = vsel %vm499, 1, 0
        %v508 = vsel %vm500, 1, 0
        %v509 = vsel %vm501, 1, 0
        %v510 = vcvt.s32.f32 %v506
        %v511 = vcvt.s32.f32 %v507
        %v512 = vcvt.s32.f32 %v508
        %v513 = vcvt.s32.f32 %v509
        %v514 = vpack.c.bf16 %v510, %v510
        %v515 = vpack.c.bf16 %v511, %v511
        %v516 = vpack.c.bf16 %v512, %v512
        %v517 = vpack.c.bf16 %v513, %v513
        %518 = vst [vmem:[%s288] sm:$0xf] %v402
        %519 = vst [vmem:[%s288 + $0x4] sm:$0xf] %v403
        %520 = vst [vmem:[%s288 + $0x8] sm:$0xf] %v404
        %521 = vst [vmem:[%s288 + $0xc] sm:$0xf] %v405
        %522 = vst [vmem:[%s288 + $0x10] sm:$0xf] %v430
        %523 = vst [vmem:[%s288 + $0x14] sm:$0xf] %v431
        %524 = vst [vmem:[%s288 + $0x18] sm:$0xf] %v432
        %525 = vst [vmem:[%s288 + $0x1c] sm:$0xf] %v433
        %526 = vst [vmem:[%s288 + $0x20] sm:$0xf] %v458
        %527 = vst [vmem:[%s288 + $0x24] sm:$0xf] %v459
        %528 = vst [vmem:[%s288 + $0x28] sm:$0xf] %v460
        %529 = vst [vmem:[%s288 + $0x2c] sm:$0xf] %v461
        %530 = vst [vmem:[%s288 + $0x30] sm:$0xf] %v486
        %531 = vst [vmem:[%s288 + $0x34] sm:$0xf] %v487
        %532 = vst [vmem:[%s288 + $0x38] sm:$0xf] %v488
        %533 = vst [vmem:[%s288 + $0x3c] sm:$0xf] %v489
        %534 = vst [vmem:[%s288 + $0x40] sm:$0xf] %v514
        %535 = vst [vmem:[%s288 + $0x44] sm:$0xf] %v515
        %536 = vst [vmem:[%s288 + $0x48] sm:$0xf] %v516
        %537 = vst [vmem:[%s288 + $0x4c] sm:$0xf] %v517
        %538 = vst [vmem:[%s295] sm:$0xff] %v502
        %539 = vst [vmem:[%s295 + $0x8] sm:$0xff] %v503
        %540 = vst [vmem:[%s295 + $0x10] sm:$0xff] %v504
        %541 = vst [vmem:[%s295 + $0x18] sm:$0xff] %v505
        %s542 = sand.u32 %s131, 1
        %s543 = scalar_lea.sflag [#allocation4], %s542
        %s544 = sand.u32 %s131, 1
        %s545 = smul.addr %s544, 80
        %s546 = scalar_lea.vmem [#allocation7], %s545
        %s547 = sand.u32 %s157, 1
        %s548 = scalar_lea.sflag [#allocation9], %s547
        %s549 = sand.u32 %s157, 1
        %s550 = smul.addr %s549, 32
        %s551 = scalar_lea.vmem [#allocation8], %s550
        // Predicated region
        $region45: #{tpu_custom_call.1} parent=35 // pred_check
          %p552 = pneg %p141
        $region46: #{tpu_custom_call.1} parent=35 // pred_check_branch
          %554 = sbr.rel (%p552) target = $region48
        $region47: #{tpu_custom_call.1} parent=35 // pred_region
          %556 = vsyncadd %s543, 0
          %s557 = smul.addr %s29, 4
          %s558 = scalar_lea.hbm %s4, %s557
          %s559 = sshll.u32 %s546, 4
          %s560 = int_to_ptr.vmem [resolvable:$true] %s559
          %s561 = sshll.u32 %s558, 4
          %s562 = int_to_ptr.hbm [resolvable:$true] %s561
          %567 = dma.vmem_to_hbm [thread:$0]  %s560, 1280, %s562, %s543, 64, 128, 4
        $region48: #{tpu_custom_call.1} parent=35 // pred_fallthru
          _
        // Predicated region
        $region49: #{tpu_custom_call.1} parent=35 // pred_check
          %p568 = pneg %p167
        $region50: #{tpu_custom_call.1} parent=35 // pred_check_branch
          %570 = sbr.rel (%p568) target = $region52
        $region51: #{tpu_custom_call.1} parent=35 // pred_region
          %572 = vsyncadd %s548, 0
          %s573 = smul.addr %s29, 8
          %s574 = scalar_lea.hbm %s5, %s573
          %s575 = sshll.u32 %s551, 4
          %s576 = int_to_ptr.vmem [resolvable:$true] %s575
          %s577 = sshll.u32 %s574, 4
          %s578 = int_to_ptr.hbm [resolvable:$true] %s577
          %583 = dma.vmem_to_hbm [thread:$0]  %s576, 512, %s578, %s548, 128, 256, 8
        $region52: #{tpu_custom_call.1} parent=35 // pred_fallthru
          _
      $region36: #{tpu_custom_call.1} parent=5 // pred_fallthru
        _
      %p584 = scmp.le.s32.totalorder 2, %s24
      // Predicated region
      $region53: #{tpu_custom_call.1} parent=5 // pred_check
        %p585 = pneg %p584
      $region54: #{tpu_custom_call.1} parent=5 // pred_check_branch
        %587 = sbr.rel (%p585) target = $region56
      $region55: #{tpu_custom_call.1} parent=5 // pred_region
        %s588 = ssub.s32 %s24, 2
        // Predicated region
        $region57: #{tpu_custom_call.1} parent=55 // pred_check
          %p589 = pneg %p147
        $region58: #{tpu_custom_call.1} parent=55 // pred_check_branch
          %591 = sbr.rel (%p589) target = $region60
        $region59: #{tpu_custom_call.1} parent=55 // pred_region
          %s592 = sand.u32 %s132, 1
          %s593 = scalar_lea.sflag [#allocation4], %s592
          %s594 = sand.u32 %s132, 1
          %s595 = smul.addr %s594, 80
          %s596 = scalar_lea.vmem [#allocation7], %s595
          %598 = dma.done %s593, 1280
        $region60: #{tpu_custom_call.1} parent=55 // pred_fallthru
          _
        // Predicated region
        $region61: #{tpu_custom_call.1} parent=55 // pred_check
          %p599 = pneg %p173
        $region62: #{tpu_custom_call.1} parent=55 // pred_check_branch
          %601 = sbr.rel (%p599) target = $region64
        $region63: #{tpu_custom_call.1} parent=55 // pred_region
          %s602 = sand.u32 %s158, 1
          %s603 = scalar_lea.sflag [#allocation9], %s602
          %s604 = sand.u32 %s158, 1
          %s605 = smul.addr %s604, 32
          %s606 = scalar_lea.vmem [#allocation8], %s605
          %608 = dma.done %s603, 512
        $region64: #{tpu_custom_call.1} parent=55 // pred_fallthru
          _
      $region56: #{tpu_custom_call.1} parent=5 // pred_fallthru
        _
    $region6: #{tpu_custom_call.1} parent=1 // loop_footer
      %s28 = sadd.s32 1, %s24
    $region7: #{tpu_custom_call.1} parent=1 // loop_footer_branch
      %23 = sbr.rel target = $region3
    $region8: #{tpu_custom_call.1} parent=1 // loop_exit
      _
    %609 = vsyncpa [#allocation3], 1
    %s610 = scalar_lea.sflag [#allocation3], 1
    %611 = vsyncpa %s610, 1
    %612 = vsyncpa [#allocation6], 1
    %s613 = scalar_lea.sflag [#allocation6], 1
    %614 = vsyncpa %s613, 1
    %615 = vsyncpa [#allocation4], 1
    %s616 = scalar_lea.sflag [#allocation4], 1
    %617 = vsyncpa %s616, 1
    %618 = vsyncpa [#allocation9], 1
    %s619 = scalar_lea.sflag [#allocation9], 1
    %620 = vsyncpa %s619, 1

</llo_original>
